<compile_context>
chip_gen: v7x
topology: tpu7x:2x2x1
jax: 0.10.0
libtpu: 0.0.40
codegen_flags: <defaults>
</compile_context>

<pallas_src>
import jax
import jax.numpy as jnp
from jax.experimental import pallas as pl
from jax.experimental.pallas import tpu as pltpu

LANES = 128


def _drop_path_kernel(scale_ref, x_ref, o_ref):
    # scale_ref: (tR, 1) float32 per-row scale (0 or 1/keep_prob).
    # x_ref / o_ref: (tR, 128) in the input dtype.
    o_ref[...] = (x_ref[...].astype(jnp.float32) * scale_ref[...]).astype(o_ref.dtype)


def _round_up(a: int, b: int) -> int:
    return ((a + b - 1) // b) * b


def _cdiv(a: int, b: int) -> int:
    return -(-a // b)


def drop_path_pallas(x, drop_prob: float, key, training: bool = True):
    """DropPath forward. `x` may have any rank >= 1; mask is per leading (batch) dim."""
    if drop_prob is None or drop_prob == 0.0 or not training:
        return x
    keep_prob = 1.0 - float(drop_prob)
    if keep_prob <= 0.0:
        # drop_prob == 1.0: every sample dropped; avoid 0 * inf = NaN.
        return jnp.zeros_like(x)

    B = x.shape[0]
    N = 1
    for d in x.shape[1:]:
        N *= d

    # Per-sample Bernoulli(keep_prob) mask: floor(keep_prob + U[0,1)), as in PyTorch.
    u = jax.random.uniform(key, (B,), dtype=jnp.float32)
    mask = jnp.floor(jnp.float32(keep_prob) + u)
    scale = mask * jnp.float32(1.0 / keep_prob)          # (B,): 0 or 1/keep_prob

    # Lane-dense layout: fold batch into rows -> (B*rows, 128).
    rows = _cdiv(N, LANES)
    padded = (rows * LANES != N)
    xf = x.reshape(B, N)
    if padded:
        # Only pad to the lane multiple (never to a tile multiple).
        xf = jnp.pad(xf, ((0, 0), (0, rows * LANES - N)))
    total_rows = B * rows
    xr = xf.reshape(total_rows, LANES)                   # free reshape on fast path

    # Tiny per-row scale stream so a tile may span samples.
    scale_rows = jnp.broadcast_to(scale[:, None], (B, rows)).reshape(total_rows, 1)

    # Row tiling: ~1 MiB payload per buffer, dtype-aware sublane multiple,
    # balanced steps (helps v7x split evenly across its two TensorCores).
    itemsize = jnp.dtype(x.dtype).itemsize
    sub = max(8, 32 // max(itemsize, 1))                 # 8 f32 / 16 bf16 / 32 int8
    target_rows = max(sub, (1 << 20) // (LANES * itemsize))
    num_steps = _cdiv(total_rows, target_rows)
    if num_steps <= 1:
        tR = total_rows                                  # full extent: always legal
        num_steps = 1
    else:
        tR = _round_up(_cdiv(total_rows, num_steps), sub)
        num_steps = _cdiv(total_rows, tR)

    out = pl.pallas_call(
        _drop_path_kernel,
        out_shape=jax.ShapeDtypeStruct((total_rows, LANES), x.dtype),
        grid=(num_steps,),
        in_specs=[
            pl.BlockSpec((tR, 1), lambda i: (i, 0)),
            pl.BlockSpec((tR, LANES), lambda i: (i, 0)),
        ],
        out_specs=pl.BlockSpec((tR, LANES), lambda i: (i, 0)),
        compiler_params=pltpu.CompilerParams(
            dimension_semantics=("parallel",),
        ),
    )(scale_rows, xr)

    if padded:
        return out.reshape(B, rows * LANES)[:, :N].reshape(x.shape)
    return out.reshape(x.shape)


class DropPath:
    """Mirror of the PyTorch module: holds drop_prob, applies drop_path in forward."""

    def __init__(self, drop_prob=None):
        self.drop_prob = drop_prob
        self.training = True

    def __call__(self, x, key=None, seed: int = 0):
        if key is None:
            key = jax.random.PRNGKey(seed)
        return drop_path_pallas(
            x, self.drop_prob if self.drop_prob else 0.0, key=key,
            training=self.training)


if __name__ == "__main__":
    key = jax.random.PRNGKey(0)
    drop_prob = 0.5
    keep_prob = 1.0 - drop_prob
    module = DropPath(drop_prob)
    module.training = True

    # (batch, seq, hidden) — typical CCT token tensor at small size (fast path).
    x = jax.random.normal(key, (2, 8, 32), dtype=jnp.float32)
    y_train = jax.block_until_ready(module(x, key=jax.random.PRNGKey(1234)))
    assert y_train.shape == x.shape and y_train.dtype == x.dtype
    for b in range(x.shape[0]):
        yb = y_train[b]
        is_zero = bool(jnp.allclose(yb, 0.0))
        is_scaled = bool(jnp.allclose(yb, x[b] / keep_prob, atol=1e-5, rtol=1e-5))
        assert is_zero or is_scaled, f"sample {b}: not a valid drop-path output"

    # Rank-4 input (e.g. conv feature map), still the zero-copy fast path.
    x4 = jax.random.normal(jax.random.PRNGKey(2), (2, 4, 16, 16), dtype=jnp.float32)
    y4 = jax.block_until_ready(module(x4, key=jax.random.PRNGKey(7)))
    for b in range(x4.shape[0]):
        yb = y4[b]
        ok = bool(jnp.allclose(yb, 0.0)) or bool(
            jnp.allclose(yb, x4[b] / keep_prob, atol=1e-5, rtol=1e-5))
        assert ok, f"rank-4 sample {b}: not a valid drop-path output"

    # Odd trailing size (exercises the lane-pad path).
    x_odd = jax.random.normal(jax.random.PRNGKey(4), (2, 5, 7), dtype=jnp.float32)
    y_odd = jax.block_until_ready(module(x_odd, key=jax.random.PRNGKey(11)))
    for b in range(x_odd.shape[0]):
        yb = y_odd[b]
        ok = bool(jnp.allclose(yb, 0.0)) or bool(
            jnp.allclose(yb, x_odd[b] / keep_prob, atol=1e-5, rtol=1e-5))
        assert ok, f"odd-shape sample {b}: not a valid drop-path output"

    # bf16 input (exercises dtype-aware tiling and f32 in-kernel math).
    x_bf = jax.random.normal(jax.random.PRNGKey(5), (2, 8, 128), dtype=jnp.bfloat16)
    y_bf = jax.block_until_ready(module(x_bf, key=jax.random.PRNGKey(13)))
    assert y_bf.dtype == jnp.bfloat16
    for b in range(x_bf.shape[0]):
        yb = y_bf[b].astype(jnp.float32)
        ref = x_bf[b].astype(jnp.float32) / keep_prob
        ok = bool(jnp.allclose(yb, 0.0)) or bool(
            jnp.allclose(yb, ref, atol=2e-2, rtol=2e-2))
        assert ok, f"bf16 sample {b}: not a valid drop-path output"

    # drop_prob == 1.0: all samples dropped, output must be exactly zero (not NaN).
    y_all_drop = jax.block_until_ready(
        drop_path_pallas(x, 1.0, key=jax.random.PRNGKey(3), training=True))
    assert bool(jnp.all(y_all_drop == 0.0))

    # Eval path: identity.
    module.training = False
    y_eval = jax.block_until_ready(module(x))
    assert bool(jnp.allclose(y_eval, x))

    print("KERNEL_OK")
</pallas_src>

<mosaic_0001>
module attributes {stable_mosaic.version = 11 : i64} {
  func.func @_drop_path_kernel(%arg0: i32, %arg1: memref<4x1xf32, #tpu.memory_space<vmem>>, %arg2: memref<4x128xf32, #tpu.memory_space<vmem>>, %arg3: memref<4x128xf32, #tpu.memory_space<vmem>>) attributes {dimension_semantics = [#tpu.dimension_semantics<parallel>], iteration_bounds = array<i64: 1>, scalar_prefetch = 0 : i64, scratch_operands = 0 : i64, tpu.core_type = #tpu.core_type<tc>, window_params = [{transform_indices = @transform_0, window_bounds = array<i64: 4, 1>}, {transform_indices = @transform_1, window_bounds = array<i64: 4, 128>}, {transform_indices = @transform_2, window_bounds = array<i64: 4, 128>}]} {
    %c0 = arith.constant 0 : index
    %c0_0 = arith.constant 0 : index
    %0 = vector.load %arg2[%c0, %c0_0] : memref<4x128xf32, #tpu.memory_space<vmem>>, vector<4x128xf32>
    %c0_1 = arith.constant 0 : index
    %c0_2 = arith.constant 0 : index
    %1 = vector.load %arg1[%c0_1, %c0_2] : memref<4x1xf32, #tpu.memory_space<vmem>>, vector<4x1xf32>
    %2 = vector.broadcast %1 : vector<4x1xf32> to vector<4x128xf32>
    %3 = arith.mulf %0, %2 : vector<4x128xf32>
    %c0_3 = arith.constant 0 : index
    %c0_4 = arith.constant 0 : index
    %4 = vector.load %arg3[%c0_3, %c0_4] : memref<4x128xf32, #tpu.memory_space<vmem>>, vector<4x128xf32>
    tpu.vector_store %arg3[%c0_3, %c0_4], %3 {strides = array<i32>} : memref<4x128xf32, #tpu.memory_space<vmem>>, vector<4x128xf32>,
    return
  }
  func.func @transform_0(%arg0: i32) -> (i32, i32) {
    %c0_i32 = arith.constant 0 : i32
    %c0_i32_0 = arith.constant 0 : i32
    return %arg0, %c0_i32 : i32, i32
  }
  func.func @transform_1(%arg0: i32) -> (i32, i32) {
    %c0_i32 = arith.constant 0 : i32
    %c0_i32_0 = arith.constant 0 : i32
    return %arg0, %c0_i32 : i32, i32
  }
  func.func @transform_2(%arg0: i32) -> (i32, i32) {
    %c0_i32 = arith.constant 0 : i32
    %c0_i32_0 = arith.constant 0 : i32
    return %arg0, %c0_i32 : i32, i32
  }
}

</mosaic_0001>

<llo_original>
// kernel: tpu_custom_call.1
$region0: #{tpu_custom_call.1}
  #allocation0 [shape = 'u32[]', space=smem, size = 0x4, offset = 0x4, fixed_abs, tag = 'smem constant byte address 0x4 - core index']
  #allocation1 [shape = 'u32[144,128]{1,0:T(1,128)}', space=vmem, size = 0x12000, scoped, tag = 'internal scratch']
  %s0 = inlined_call_operand.vmem [shape: f32[4,1], index: 0, kind: input, shape index: {}]
  %s1 = inlined_call_operand.vmem [shape: f32[4,128], index: 1, kind: input, shape index: {}]
  %s2 = inlined_call_operand.hbm [shape: f32[4,128], index: 2, kind: output, shape index: {}]
  %s3 = sld [smem:[#allocation0]]
  $region18: #{tpu_custom_call.1} parent=0
    _
  %s5 = ssub.s32 1, %s3
  %s6 = scalar_select 0, %s5, %s3
  $region1: #{tpu_custom_call.1} parent=0
    #allocation2 [shape = 'u8[2048]{0}', space=vmem, size = 0x800, scoped, tag = 'output window, operand 0, single buffered']
    #allocation3 [shape = 's32[1]{0}', space=sflag, size = 0x4, scoped, tag = 'scoped memory for tpu_custom_call.1']
    %7 = vsyncpa [#allocation3], 0
    // Predicated region
    $region2: #{tpu_custom_call.1} parent=1 // pred_check
      _
    $region3: #{tpu_custom_call.1} parent=1 // pred_check_branch
      %9 = sbr.rel (0) target = $region5
    $region4: #{tpu_custom_call.1} parent=1 // pred_region
      _
    $region5: #{tpu_custom_call.1} parent=1 // pred_fallthru
      _
    // Predicated region
    $region6: #{tpu_custom_call.1} parent=1 // pred_check
      _
    $region7: #{tpu_custom_call.1} parent=1 // pred_check_branch
      %11 = sbr.rel (0) target = $region9
    $region8: #{tpu_custom_call.1} parent=1 // pred_region
      _
    $region9: #{tpu_custom_call.1} parent=1 // pred_fallthru
      _
    %v12 = vld [vmem:[%s1] sm:$0xf]
    %v13 = vld [vmem:[%s0] sm:$0xf]
    %15 = vset.pattern.permute.xlu0 0
    %16 = vperm.xlu0 %15, %v13
    %v17 = vpop.permute.xlu0 %16
    %v19 = vmul.f32 %v12, %v17
    %20 = vst [vmem:[#allocation2] sm:$0xf] %v19
    // Predicated region
    $region10: #{tpu_custom_call.1} parent=1 // pred_check
      _
    $region11: #{tpu_custom_call.1} parent=1 // pred_check_branch
      %22 = sbr.rel (0) target = $region13
    $region12: #{tpu_custom_call.1} parent=1 // pred_region
      %s24 = ssub.s32 64, 64
      %25 = vsyncadd [#allocation3], %s24
      %s27 = sshll.u32 [#allocation2], 4
      %s28 = int_to_ptr.vmem [resolvable:$true] %s27
      %30 = dma.vmem_to_hbm [thread:$0]  %s28, 64, %s2, [#allocation3]
    $region13: #{tpu_custom_call.1} parent=1 // pred_fallthru
      _
    // Predicated region
    $region14: #{tpu_custom_call.1} parent=1 // pred_check
      _
    $region15: #{tpu_custom_call.1} parent=1 // pred_check_branch
      %32 = sbr.rel (0) target = $region17
    $region16: #{tpu_custom_call.1} parent=1 // pred_region
      %33 = dma.done [#allocation3], 64
    $region17: #{tpu_custom_call.1} parent=1 // pred_fallthru
      _
    %34 = vsyncpa [#allocation3], 1

</llo_original>
